<compile_context>
chip_gen: v7x
topology: tpu7x:2x2x1
jax: 0.10.0
libtpu: 0.0.40
codegen_flags: <defaults>
</compile_context>

<pallas_src>
import jax
import jax.numpy as jnp
from jax.experimental import pallas as pl
from jax.experimental.pallas import tpu as pltpu

LANES = 128
SUBLANES = 8
MAX_TILE_ROWS = 2048   # 2048 x 128 x 4B = 1 MiB per f32 input buffer
NCORES = 2             # leading "parallel" grid axis (v7x megacore); harmless on 1-TC chips


def _round_up(x, m):
    return ((x + m - 1) // m) * m


def _masked_max_count_kernel(pred_ref, targ_ref, out_ref, acc_max, acc_cnt):
    """Pass 1: per-core running max of |target - pred| and count over target > 0."""
    t_idx = pl.program_id(1)

    @pl.when(t_idx == 0)
    def _init():
        acc_max[...] = jnp.zeros_like(acc_max)   # diffs are >= 0, so 0 is the max identity
        acc_cnt[...] = jnp.zeros_like(acc_cnt)

    t = targ_ref[...].astype(jnp.float32)
    p = pred_ref[...].astype(jnp.float32)
    mask = t > 0.0
    d = jnp.where(mask, jnp.abs(t - p), 0.0)

    # (tile_rows, 128) -> (tile_rows//8, 8, 128): layout-preserving (whole vregs);
    # reducing over the leading axis is pure elementwise VPU work (no XLU).
    d3 = d.reshape(-1, SUBLANES, LANES)
    c3 = mask.astype(jnp.float32).reshape(-1, SUBLANES, LANES)
    acc_max[...] = jnp.maximum(acc_max[...], jnp.max(d3, axis=0))
    acc_cnt[...] += jnp.sum(c3, axis=0)

    @pl.when(t_idx == pl.num_programs(1) - 1)
    def _fin():
        out_ref[0, 0] = acc_max[...]
        out_ref[0, 1] = acc_cnt[...]


def _berhu_sum_kernel(params_ref, pred_ref, targ_ref, out_ref, acc_sum):
    """Pass 2: per-core sum of per-element BerHu loss over target > 0."""
    t_idx = pl.program_id(1)

    @pl.when(t_idx == 0)
    def _init():
        acc_sum[...] = jnp.zeros_like(acc_sum)

    delta = params_ref[0]        # thresh * max(|diff|)
    inv_2delta = params_ref[1]   # 0.5 / delta (precomputed in the wrapper; no in-kernel divide)

    t = targ_ref[...].astype(jnp.float32)
    p = pred_ref[...].astype(jnp.float32)
    d = jnp.where(t > 0.0, jnp.abs(t - p), 0.0)

    # BerHu, exactly matching the torch threshold() formulation (strict <, >):
    #   d <  delta -> d
    #   d >  delta -> d^2 / (2*delta)
    #   d == delta -> 0
    loss = jnp.where(d < delta, d, 0.0) + jnp.where(d > delta, d * d * inv_2delta, 0.0)

    acc_sum[...] += jnp.sum(loss.reshape(-1, SUBLANES, LANES), axis=0)

    @pl.when(t_idx == pl.num_programs(1) - 1)
    def _fin():
        out_ref[0] = acc_sum[...]


def masked_berhu_loss(pred, target, thresh=0.2):
    assert pred.ndim == target.ndim, "inconsistent dimensions"
    assert pred.shape == target.shape

    n = pred.size
    pred_f = jnp.ravel(pred)      # free reshape; keep original dtype (kernel casts per tile)
    targ_f = jnp.ravel(target)

    # Adaptive tiling: small inputs -> tiny tile/pad, large inputs -> 2048-row tiles.
    rows_raw = pl.cdiv(n, LANES)
    tile_rows = min(MAX_TILE_ROWS, _round_up(pl.cdiv(rows_raw, NCORES), SUBLANES))
    block_rows = NCORES * tile_rows
    rows = _round_up(rows_raw, block_rows)
    total = rows * LANES
    if total != n:
        # zero padding is safe: padded target == 0 -> mask False in both passes.
        pred_f = jnp.pad(pred_f, (0, total - n))
        targ_f = jnp.pad(targ_f, (0, total - n))
    pred_2d = pred_f.reshape(rows, LANES)
    targ_2d = targ_f.reshape(rows, LANES)

    tiles_per_core = rows // block_rows
    grid = (NCORES, tiles_per_core)
    data_spec = pl.BlockSpec((tile_rows, LANES),
                             lambda c, t: (c * tiles_per_core + t, 0))
    cparams = pltpu.CompilerParams(dimension_semantics=("parallel", "arbitrary"))

    # ---- pass 1: masked max of |target - pred| and masked element count ----
    stats_slab = pl.pallas_call(
        _masked_max_count_kernel,
        out_shape=jax.ShapeDtypeStruct((NCORES, 2, SUBLANES, LANES), jnp.float32),
        grid_spec=pltpu.PrefetchScalarGridSpec(
            num_scalar_prefetch=0,
            grid=grid,
            in_specs=[data_spec, data_spec],
            out_specs=pl.BlockSpec((1, 2, SUBLANES, LANES),
                                   lambda c, t: (c, 0, 0, 0)),
            scratch_shapes=[
                pltpu.VMEM((SUBLANES, LANES), jnp.float32),  # running max
                pltpu.VMEM((SUBLANES, LANES), jnp.float32),  # valid count
            ],
        ),
        compiler_params=cparams,
    )(pred_2d, targ_2d)

    delta = (thresh * jnp.max(stats_slab[:, 0])).astype(jnp.float32)
    valid_cnt = jnp.sum(stats_slab[:, 1])
    # [delta, 1/(2*delta)] as SMEM scalars for pass 2.
    params = jnp.stack([delta, 0.5 / delta]).astype(jnp.float32)

    # ---- pass 2: sum of per-element BerHu loss over valid elements ----
    sum_slab = pl.pallas_call(
        _berhu_sum_kernel,
        out_shape=jax.ShapeDtypeStruct((NCORES, SUBLANES, LANES), jnp.float32),
        grid_spec=pltpu.PrefetchScalarGridSpec(
            num_scalar_prefetch=0,
            grid=grid,
            in_specs=[
                pl.BlockSpec(memory_space=pltpu.MemorySpace.SMEM),  # params (2,)
                data_spec,
                data_spec,
            ],
            out_specs=pl.BlockSpec((1, SUBLANES, LANES), lambda c, t: (c, 0, 0)),
            scratch_shapes=[pltpu.VMEM((SUBLANES, LANES), jnp.float32)],
        ),
        compiler_params=cparams,
    )(params, pred_2d, targ_2d)

    loss_sum = jnp.sum(sum_slab)
    # No valid elements -> 0/0 -> NaN (torch raises on the empty max; degenerate case).
    return (loss_sum / valid_cnt).astype(jnp.float32)


if __name__ == "__main__":
    key = jax.random.PRNGKey(0)
    k1, k2 = jax.random.split(key)
    # small NCHW inputs: batch=2, channels=4, spatial=16x16
    pred = jax.random.normal(k1, (2, 4, 16, 16), dtype=jnp.float32)
    # target: mix of positive and non-positive values so the mask is nontrivial
    target = jax.random.normal(k2, (2, 4, 16, 16), dtype=jnp.float32)

    loss = jax.block_until_ready(jax.jit(masked_berhu_loss)(pred, target))

    # pure-JAX reference of the torch MaskedBerHuLoss forward
    thresh = 0.2
    mask = target > 0
    diff = jnp.where(mask, jnp.abs(target - pred), 0.0)
    delta = thresh * jnp.max(diff)
    part1 = jnp.where(diff < delta, diff, 0.0)
    part2 = jnp.where(diff > delta, diff * diff, 0.0) / (2.0 * delta)
    ref = jnp.sum(jnp.where(mask, part1 + part2, 0.0)) / jnp.sum(mask.astype(jnp.float32))
    assert jnp.allclose(loss, ref, rtol=1e-5, atol=1e-6), (loss, ref)

    print("KERNEL_OK")
</pallas_src>

<mosaic_0001>
module attributes {stable_mosaic.version = 11 : i64} {
  func.func @_masked_max_count_kernel(%arg0: i32, %arg1: i32, %arg2: memref<8x128xf32, #tpu.memory_space<vmem>>, %arg3: memref<8x128xf32, #tpu.memory_space<vmem>>, %arg4: memref<1x2x8x128xf32, #tpu.memory_space<vmem>>, %arg5: memref<8x128xf32, #tpu.memory_space<vmem>>, %arg6: memref<8x128xf32, #tpu.memory_space<vmem>>) attributes {dimension_semantics = [#tpu.dimension_semantics<parallel>, #tpu.dimension_semantics<arbitrary>], iteration_bounds = array<i64: 2, 1>, scalar_prefetch = 0 : i64, scratch_operands = 2 : i64, tpu.core_type = #tpu.core_type<tc>, window_params = [{transform_indices = @transform_0, window_bounds = array<i64: 8, 128>}, {transform_indices = @transform_1, window_bounds = array<i64: 8, 128>}, {transform_indices = @transform_2, window_bounds = array<i64: 1, 2, 8, 128>}]} {
    %c0_i32 = arith.constant 0 : i32
    %0 = arith.cmpi eq, %arg1, %c0_i32 : i32
    %1 = arith.extui %0 : i1 to i32
    %c0_i32_0 = arith.constant 0 : i32
    %2 = arith.cmpi ne, %1, %c0_i32_0 : i32
    scf.if %2 {
      %cst_17 = arith.constant 0.000000e+00 : f32
      %26 = vector.broadcast %cst_17 : f32 to vector<8x128xf32>
      %c0_18 = arith.constant 0 : index
      %c0_19 = arith.constant 0 : index
      %27 = vector.load %arg5[%c0_18, %c0_19] : memref<8x128xf32, #tpu.memory_space<vmem>>, vector<8x128xf32>
      tpu.vector_store %arg5[%c0_18, %c0_19], %26 {strides = array<i32>} : memref<8x128xf32, #tpu.memory_space<vmem>>, vector<8x128xf32>,
      %cst_20 = arith.constant 0.000000e+00 : f32
      %28 = vector.broadcast %cst_20 : f32 to vector<8x128xf32>
      %c0_21 = arith.constant 0 : index
      %c0_22 = arith.constant 0 : index
      %29 = vector.load %arg6[%c0_21, %c0_22] : memref<8x128xf32, #tpu.memory_space<vmem>>, vector<8x128xf32>
      tpu.vector_store %arg6[%c0_21, %c0_22], %28 {strides = array<i32>} : memref<8x128xf32, #tpu.memory_space<vmem>>, vector<8x128xf32>,
    } else {
    }
    %c0 = arith.constant 0 : index
    %c0_1 = arith.constant 0 : index
    %3 = vector.load %arg3[%c0, %c0_1] : memref<8x128xf32, #tpu.memory_space<vmem>>, vector<8x128xf32>
    %c0_2 = arith.constant 0 : index
    %c0_3 = arith.constant 0 : index
    %4 = vector.load %arg2[%c0_2, %c0_3] : memref<8x128xf32, #tpu.memory_space<vmem>>, vector<8x128xf32>
    %cst = arith.constant 0.000000e+00 : f32
    %5 = vector.broadcast %cst : f32 to vector<8x128xf32>
    %6 = arith.cmpf ogt, %3, %5 : vector<8x128xf32>
    %7 = arith.subf %3, %4 : vector<8x128xf32>
    %8 = math.absf %7 : vector<8x128xf32>
    %cst_4 = arith.constant 0.000000e+00 : f32
    %9 = vector.broadcast %cst_4 : f32 to vector<8x128xf32>
    %10 = arith.select %6, %8, %9 : vector<8x128xi1>, vector<8x128xf32>
    %11 = vector.shape_cast %10 : vector<8x128xf32> to vector<1x8x128xf32>
    %12 = arith.extui %6 : vector<8x128xi1> to vector<8x128xi32>
    %13 = arith.sitofp %12 : vector<8x128xi32> to vector<8x128xf32>
    %14 = vector.shape_cast %13 : vector<8x128xf32> to vector<1x8x128xf32>
    %c0_5 = arith.constant 0 : index
    %c0_6 = arith.constant 0 : index
    %15 = vector.load %arg5[%c0_5, %c0_6] : memref<8x128xf32, #tpu.memory_space<vmem>>, vector<8x128xf32>
    %cst_7 = arith.constant dense<0xFF800000> : vector<8x128xf32>
    %16 = vector.multi_reduction <maximumf>, %11, %cst_7 [0] : vector<1x8x128xf32> to vector<8x128xf32>
    %17 = arith.maximumf %15, %16 : vector<8x128xf32>
    %c0_8 = arith.constant 0 : index
    %c0_9 = arith.constant 0 : index
    %18 = vector.load %arg5[%c0_8, %c0_9] : memref<8x128xf32, #tpu.memory_space<vmem>>, vector<8x128xf32>
    tpu.vector_store %arg5[%c0_8, %c0_9], %17 {strides = array<i32>} : memref<8x128xf32, #tpu.memory_space<vmem>>, vector<8x128xf32>,
    %c0_10 = arith.constant 0 : index
    %c0_11 = arith.constant 0 : index
    %19 = vector.load %arg6[%c0_10, %c0_11] : memref<8x128xf32, #tpu.memory_space<vmem>>, vector<8x128xf32>
    %cst_12 = arith.constant dense<0.000000e+00> : vector<8x128xf32>
    %20 = vector.multi_reduction <add>, %14, %cst_12 [0] : vector<1x8x128xf32> to vector<8x128xf32>
    %21 = arith.addf %19, %20 : vector<8x128xf32>
    %c0_13 = arith.constant 0 : index
    %c0_14 = arith.constant 0 : index
    %22 = vector.load %arg6[%c0_13, %c0_14] : memref<8x128xf32, #tpu.memory_space<vmem>>, vector<8x128xf32>
    tpu.vector_store %arg6[%c0_13, %c0_14], %21 {strides = array<i32>} : memref<8x128xf32, #tpu.memory_space<vmem>>, vector<8x128xf32>,
    %c0_i32_15 = arith.constant 0 : i32
    %23 = arith.cmpi eq, %arg1, %c0_i32_15 : i32
    %24 = arith.extui %23 : i1 to i32
    %c0_i32_16 = arith.constant 0 : i32
    %25 = arith.cmpi ne, %24, %c0_i32_16 : i32
    scf.if %25 {
      %c0_17 = arith.constant 0 : index
      %c0_18 = arith.constant 0 : index
      %26 = vector.load %arg5[%c0_17, %c0_18] : memref<8x128xf32, #tpu.memory_space<vmem>>, vector<8x128xf32>
      %c0_19 = arith.constant 0 : index
      %c0_20 = arith.constant 0 : index
      %c0_21 = arith.constant 0 : index
      %c0_22 = arith.constant 0 : index
      %27 = vector.load %arg4[%c0_19, %c0_20, %c0_21, %c0_22] : memref<1x2x8x128xf32, #tpu.memory_space<vmem>>, vector<1x1x8x128xf32>
      %28 = vector.shape_cast %27 : vector<1x1x8x128xf32> to vector<8x128xf32>
      %29 = vector.shape_cast %26 : vector<8x128xf32> to vector<1x1x8x128xf32>
      tpu.vector_store %arg4[%c0_19, %c0_20, %c0_21, %c0_22], %29 {strides = array<i32>} : memref<1x2x8x128xf32, #tpu.memory_space<vmem>>, vector<1x1x8x128xf32>,
      %c0_23 = arith.constant 0 : index
      %c0_24 = arith.constant 0 : index
      %30 = vector.load %arg6[%c0_23, %c0_24] : memref<8x128xf32, #tpu.memory_space<vmem>>, vector<8x128xf32>
      %c0_25 = arith.constant 0 : index
      %c1 = arith.constant 1 : index
      %c0_26 = arith.constant 0 : index
      %c0_27 = arith.constant 0 : index
      %31 = vector.load %arg4[%c0_25, %c1, %c0_26, %c0_27] : memref<1x2x8x128xf32, #tpu.memory_space<vmem>>, vector<1x1x8x128xf32>
      %32 = vector.shape_cast %31 : vector<1x1x8x128xf32> to vector<8x128xf32>
      %33 = vector.shape_cast %30 : vector<8x128xf32> to vector<1x1x8x128xf32>
      tpu.vector_store %arg4[%c0_25, %c1, %c0_26, %c0_27], %33 {strides = array<i32>} : memref<1x2x8x128xf32, #tpu.memory_space<vmem>>, vector<1x1x8x128xf32>,
    } else {
    }
    return
  }
  func.func @transform_0(%arg0: i32, %arg1: i32) -> (i32, i32) {
    %c1_i32 = arith.constant 1 : i32
    %0 = arith.muli %arg0, %c1_i32 : i32
    %1 = arith.addi %0, %arg1 : i32
    %c0_i32 = arith.constant 0 : i32
    %c0_i32_0 = arith.constant 0 : i32
    return %1, %c0_i32 : i32, i32
  }
  func.func @transform_1(%arg0: i32, %arg1: i32) -> (i32, i32) {
    %c1_i32 = arith.constant 1 : i32
    %0 = arith.muli %arg0, %c1_i32 : i32
    %1 = arith.addi %0, %arg1 : i32
    %c0_i32 = arith.constant 0 : i32
    %c0_i32_0 = arith.constant 0 : i32
    return %1, %c0_i32 : i32, i32
  }
  func.func @transform_2(%arg0: i32, %arg1: i32) -> (i32, i32, i32, i32) {
    %c0_i32 = arith.constant 0 : i32
    %c0_i32_0 = arith.constant 0 : i32
    %c0_i32_1 = arith.constant 0 : i32
    %c0_i32_2 = arith.constant 0 : i32
    return %arg0, %c0_i32, %c0_i32_0, %c0_i32_1 : i32, i32, i32, i32
  }
}

module attributes {stable_mosaic.version = 11 : i64} {
  func.func @_berhu_sum_kernel(%arg0: i32, %arg1: i32, %arg2: memref<2xf32, #tpu.memory_space<smem>>, %arg3: memref<8x128xf32, #tpu.memory_space<vmem>>, %arg4: memref<8x128xf32, #tpu.memory_space<vmem>>, %arg5: memref<1x8x128xf32, #tpu.memory_space<vmem>>, %arg6: memref<8x128xf32, #tpu.memory_space<vmem>>) attributes {dimension_semantics = [#tpu.dimension_semantics<parallel>, #tpu.dimension_semantics<arbitrary>], iteration_bounds = array<i64: 2, 1>, scalar_prefetch = 0 : i64, scratch_operands = 1 : i64, tpu.core_type = #tpu.core_type<tc>, window_params = [{transform_indices = @transform_0, window_bounds = array<i64: 2>}, {transform_indices = @transform_1, window_bounds = array<i64: 8, 128>}, {transform_indices = @transform_2, window_bounds = array<i64: 8, 128>}, {transform_indices = @transform_3, window_bounds = array<i64: 1, 8, 128>}]} {
    %c0_i32 = arith.constant 0 : i32
    %0 = arith.cmpi eq, %arg1, %c0_i32 : i32
    %1 = arith.extui %0 : i1 to i32
    %c0_i32_0 = arith.constant 0 : i32
    %2 = arith.cmpi ne, %1, %c0_i32_0 : i32
    scf.if %2 {
      %cst_15 = arith.constant 0.000000e+00 : f32
      %33 = vector.broadcast %cst_15 : f32 to vector<8x128xf32>
      %c0_16 = arith.constant 0 : index
      %c0_17 = arith.constant 0 : index
      %34 = vector.load %arg6[%c0_16, %c0_17] : memref<8x128xf32, #tpu.memory_space<vmem>>, vector<8x128xf32>
      tpu.vector_store %arg6[%c0_16, %c0_17], %33 {strides = array<i32>} : memref<8x128xf32, #tpu.memory_space<vmem>>, vector<8x128xf32>,
    } else {
    }
    %c0 = arith.constant 0 : index
    %3 = memref.load %arg2[%c0] : memref<2xf32, #tpu.memory_space<smem>>
    %c1 = arith.constant 1 : index
    %4 = memref.load %arg2[%c1] : memref<2xf32, #tpu.memory_space<smem>>
    %c0_1 = arith.constant 0 : index
    %c0_2 = arith.constant 0 : index
    %5 = vector.load %arg4[%c0_1, %c0_2] : memref<8x128xf32, #tpu.memory_space<vmem>>, vector<8x128xf32>
    %c0_3 = arith.constant 0 : index
    %c0_4 = arith.constant 0 : index
    %6 = vector.load %arg3[%c0_3, %c0_4] : memref<8x128xf32, #tpu.memory_space<vmem>>, vector<8x128xf32>
    %cst = arith.constant 0.000000e+00 : f32
    %7 = vector.broadcast %cst : f32 to vector<8x128xf32>
    %8 = arith.cmpf ogt, %5, %7 : vector<8x128xf32>
    %9 = arith.subf %5, %6 : vector<8x128xf32>
    %10 = math.absf %9 : vector<8x128xf32>
    %cst_5 = arith.constant 0.000000e+00 : f32
    %11 = vector.broadcast %cst_5 : f32 to vector<8x128xf32>
    %12 = arith.select %8, %10, %11 : vector<8x128xi1>, vector<8x128xf32>
    %13 = vector.broadcast %3 : f32 to vector<8x128xf32>
    %14 = arith.cmpf olt, %12, %13 : vector<8x128xf32>
    %cst_6 = arith.constant 0.000000e+00 : f32
    %15 = vector.broadcast %cst_6 : f32 to vector<8x128xf32>
    %16 = arith.select %14, %12, %15 : vector<8x128xi1>, vector<8x128xf32>
    %17 = vector.broadcast %3 : f32 to vector<8x128xf32>
    %18 = arith.cmpf ogt, %12, %17 : vector<8x128xf32>
    %19 = arith.mulf %12, %12 : vector<8x128xf32>
    %20 = vector.broadcast %4 : f32 to vector<8x128xf32>
    %21 = arith.mulf %19, %20 : vector<8x128xf32>
    %cst_7 = arith.constant 0.000000e+00 : f32
    %22 = vector.broadcast %cst_7 : f32 to vector<8x128xf32>
    %23 = arith.select %18, %21, %22 : vector<8x128xi1>, vector<8x128xf32>
    %24 = arith.addf %16, %23 : vector<8x128xf32>
    %c0_8 = arith.constant 0 : index
    %c0_9 = arith.constant 0 : index
    %25 = vector.load %arg6[%c0_8, %c0_9] : memref<8x128xf32, #tpu.memory_space<vmem>>, vector<8x128xf32>
    %26 = vector.shape_cast %24 : vector<8x128xf32> to vector<1x8x128xf32>
    %cst_10 = arith.constant dense<0.000000e+00> : vector<8x128xf32>
    %27 = vector.multi_reduction <add>, %26, %cst_10 [0] : vector<1x8x128xf32> to vector<8x128xf32>
    %28 = arith.addf %25, %27 : vector<8x128xf32>
    %c0_11 = arith.constant 0 : index
    %c0_12 = arith.constant 0 : index
    %29 = vector.load %arg6[%c0_11, %c0_12] : memref<8x128xf32, #tpu.memory_space<vmem>>, vector<8x128xf32>
    tpu.vector_store %arg6[%c0_11, %c0_12], %28 {strides = array<i32>} : memref<8x128xf32, #tpu.memory_space<vmem>>, vector<8x128xf32>,
    %c0_i32_13 = arith.constant 0 : i32
    %30 = arith.cmpi eq, %arg1, %c0_i32_13 : i32
    %31 = arith.extui %30 : i1 to i32
    %c0_i32_14 = arith.constant 0 : i32
    %32 = arith.cmpi ne, %31, %c0_i32_14 : i32
    scf.if %32 {
      %c0_15 = arith.constant 0 : index
      %c0_16 = arith.constant 0 : index
      %33 = vector.load %arg6[%c0_15, %c0_16] : memref<8x128xf32, #tpu.memory_space<vmem>>, vector<8x128xf32>
      %c0_17 = arith.constant 0 : index
      %c0_18 = arith.constant 0 : index
      %c0_19 = arith.constant 0 : index
      %34 = vector.load %arg5[%c0_17, %c0_18, %c0_19] : memref<1x8x128xf32, #tpu.memory_space<vmem>>, vector<1x8x128xf32>
      %35 = vector.shape_cast %34 : vector<1x8x128xf32> to vector<8x128xf32>
      %36 = vector.shape_cast %33 : vector<8x128xf32> to vector<1x8x128xf32>
      tpu.vector_store %arg5[%c0_17, %c0_18, %c0_19], %36 {strides = array<i32>} : memref<1x8x128xf32, #tpu.memory_space<vmem>>, vector<1x8x128xf32>,
    } else {
    }
    return
  }
  func.func @transform_0(%arg0: i32, %arg1: i32) -> i32 {
    %c0_i32 = arith.constant 0 : i32
    %c0_i32_0 = arith.constant 0 : i32
    return %c0_i32 : i32
  }
  func.func @transform_1(%arg0: i32, %arg1: i32) -> (i32, i32) {
    %c1_i32 = arith.constant 1 : i32
    %0 = arith.muli %arg0, %c1_i32 : i32
    %1 = arith.addi %0, %arg1 : i32
    %c0_i32 = arith.constant 0 : i32
    %c0_i32_0 = arith.constant 0 : i32
    return %1, %c0_i32 : i32, i32
  }
  func.func @transform_2(%arg0: i32, %arg1: i32) -> (i32, i32) {
    %c1_i32 = arith.constant 1 : i32
    %0 = arith.muli %arg0, %c1_i32 : i32
    %1 = arith.addi %0, %arg1 : i32
    %c0_i32 = arith.constant 0 : i32
    %c0_i32_0 = arith.constant 0 : i32
    return %1, %c0_i32 : i32, i32
  }
  func.func @transform_3(%arg0: i32, %arg1: i32) -> (i32, i32, i32) {
    %c0_i32 = arith.constant 0 : i32
    %c0_i32_0 = arith.constant 0 : i32
    %c0_i32_1 = arith.constant 0 : i32
    return %arg0, %c0_i32, %c0_i32_0 : i32, i32, i32
  }
}

</mosaic_0001>

<llo_original>
// kernel: masked_berhu_loss.2
$region0: #{masked_berhu_loss.2}
  #allocation0 [shape = 'u32[]', space=smem, size = 0x4, offset = 0x4, fixed_abs, tag = 'smem constant byte address 0x4 - core index']
  #allocation1 [shape = 'u32[144,128]{1,0:T(1,128)}', space=vmem, size = 0x12000, scoped, tag = 'internal scratch']
  #allocation2 [shape = 'f32[8,128]{1,0:T(8,128)}', space=vmem, size = 0x1000, scoped, tag = 'scratch operand']
  #allocation3 [shape = 'f32[8,128]{1,0:T(8,128)}', space=vmem, size = 0x1000, scoped, tag = 'scratch operand']
  %s0 = inlined_call_operand.vmem [shape: f32[16,128], index: 0, kind: input, shape index: {}]
  %s1 = inlined_call_operand.vmem [shape: f32[16,128], index: 1, kind: input, shape index: {}]
  %s2 = inlined_call_operand.vmem [shape: f32[2,2,8,128], index: 2, kind: output, shape index: {}]
  %s3 = sld [smem:[#allocation0]]
  $region49: #{masked_berhu_loss.2} parent=0
    _
  %s5 = ssub.s32 1, %s3
  %s6 = scalar_select 0, %s5, %s3
  loop: start=0, step=1, limit=4
  $region2: #{masked_berhu_loss.2} parent=0 // loop_pre_header
    _
  $region3: #{masked_berhu_loss.2} parent=0 // loop_header
    %s8 = sphi 0, %s12
    %p9 = scmp.ge.s32.totalorder %s8, 4
    %s15 = sphi 0, %s27
    %s16 = sphi 0, %s23
    %s17 = sphi 0, %s15
    %s18 = sphi 0, %s16
    %s19 = sphi 0, %s17
    %s20 = sphi 0, %s18
    %s32 = sphi 0, %s34
    %s35 = sphi 0, %s32
    %s36 = sphi 0, %s35
    %s52 = sphi 0, %s36
    %s60 = sphi 0, %s62
    %s63 = sphi 0, %s60
    %s64 = sphi 0, %s63
    %s80 = sphi 0, %s64
    %s86 = sphi 0, %s88
    %s89 = sphi 0, %s86
    %s90 = sphi 0, %s89
    %s106 = sphi 0, %s90
  $region4: #{masked_berhu_loss.2} parent=0 // loop_header_branch
    %11 = sbr.rel (%p9) target = $region8
  $region5: #{masked_berhu_loss.2} parent=0 // loop_body
    %s13 = ssub.s32 %s8, 1
    %s14 = ssub.s32 %s8, 2
    %s21 = sadd.s32 1, %s16
    %p22 = scmp.ge.s32.totalorder %s21, 1
    %s23 = scalar_select %p22, 0, %s21
    %s24 = sadd.s32 1, %s15
    %s25 = scalar_select %p22, %s24, %s15
    %p26 = scmp.ge.s32.totalorder %s25, 2
    %s27 = scalar_select %p26, 0, %s25
    %s28 = sadd.s32 %s15, %s16
    %s29 = sadd.s32 %s27, %s23
    %s30 = ssub.s32 %s28, %s29
    %p31 = scmp.eq.s32.totalorder %s30, 0
    %s33 = sadd.s32 %s32, 1
    %s34 = scalar_select %p31, %s32, %s33
    %p37 = pneg %p31
    %p38 = scmp.eq.s32.totalorder %s8, 1
    %p39 = por %p37, %p38
    %p40 = scmp.ne.s32.totalorder %s32, %s35
    %p41 = scmp.eq.s32.totalorder %s8, 0
    %p42 = por %p40, %p41
    %p43 = scmp.ne.s32.totalorder %s32, %s35
    %p44 = scmp.eq.s32.totalorder %s13, 1
    %p45 = por %p43, %p44
    %p46 = scmp.ne.s32.totalorder %s35, %s36
    %p47 = scmp.eq.s32.totalorder %s13, 0
    %p48 = por %p46, %p47
    %p49 = scmp.ne.s32.totalorder %s35, %s36
    %p50 = scmp.eq.s32.totalorder %s14, 1
    %p51 = por %p49, %p50
    %p53 = scmp.ne.s32.totalorder %s36, %s52
    %p54 = scmp.eq.s32.totalorder %s14, 0
    %p55 = por %p53, %p54
    %s56 = sadd.s32 %s15, %s16
    %s57 = sadd.s32 %s27, %s23
    %s58 = ssub.s32 %s56, %s57
    %p59 = scmp.eq.s32.totalorder %s58, 0
    %s61 = sadd.s32 %s60, 1
    %s62 = scalar_select %p59, %s60, %s61
    %p65 = pneg %p59
    %p66 = scmp.eq.s32.totalorder %s8, 1
    %p67 = por %p65, %p66
    %p68 = scmp.ne.s32.totalorder %s60, %s63
    %p69 = scmp.eq.s32.totalorder %s8, 0
    %p70 = por %p68, %p69
    %p71 = scmp.ne.s32.totalorder %s60, %s63
    %p72 = scmp.eq.s32.totalorder %s13, 1
    %p73 = por %p71, %p72
    %p74 = scmp.ne.s32.totalorder %s63, %s64
    %p75 = scmp.eq.s32.totalorder %s13, 0
    %p76 = por %p74, %p75
    %p77 = scmp.ne.s32.totalorder %s63, %s64
    %p78 = scmp.eq.s32.totalorder %s14, 1
    %p79 = por %p77, %p78
    %p81 = scmp.ne.s32.totalorder %s64, %s80
    %p82 = scmp.eq.s32.totalorder %s14, 0
    %p83 = por %p81, %p82
    %s84 = ssub.s32 %s15, %s27
    %p85 = scmp.eq.s32.totalorder %s84, 0
    %s87 = sadd.s32 %s86, 1
    %s88 = scalar_select %p85, %s86, %s87
    %p91 = pneg %p85
    %p92 = scmp.eq.s32.totalorder %s8, 1
    %p93 = por %p91, %p92
    %p94 = scmp.ne.s32.totalorder %s86, %s89
    %p95 = scmp.eq.s32.totalorder %s8, 0
    %p96 = por %p94, %p95
    %p97 = scmp.ne.s32.totalorder %s86, %s89
    %p98 = scmp.eq.s32.totalorder %s13, 1
    %p99 = por %p97, %p98
    %p100 = scmp.ne.s32.totalorder %s89, %s90
    %p101 = scmp.eq.s32.totalorder %s13, 0
    %p102 = por %p100, %p101
    %p103 = scmp.ne.s32.totalorder %s89, %s90
    %p104 = scmp.eq.s32.totalorder %s14, 1
    %p105 = por %p103, %p104
    %p107 = scmp.ne.s32.totalorder %s90, %s106
    %p108 = scmp.eq.s32.totalorder %s14, 0
    %p109 = por %p107, %p108
    %p110 = scmp.le.s32.totalorder 1, %s8
    %p111 = scmp.lt.s32.totalorder %s8, 3
    %p112 = pnand %p110, %p111
    %p113 = pneg %p112
    // Predicated region
    $region9: #{masked_berhu_loss.2} parent=5 // pred_check
      _
    $region10: #{masked_berhu_loss.2} parent=5 // pred_check_branch
      %115 = sbr.rel (%p112) target = $region12
    $region11: #{masked_berhu_loss.2} parent=5 // pred_region
      %s116 = ssub.s32 %s8, 1
    $region12: #{masked_berhu_loss.2} parent=5 // pred_fallthru
      _
    %p117 = scmp.lt.s32.totalorder %s8, 2
    // Predicated region
    $region13: #{masked_berhu_loss.2} parent=5 // pred_check
      %p118 = pneg %p117
    $region14: #{masked_berhu_loss.2} parent=5 // pred_check_branch
      %120 = sbr.rel (%p118) target = $region16
    $region15: #{masked_berhu_loss.2} parent=5 // pred_region
      // Predicated region
      $region17: #{masked_berhu_loss.2} parent=15 // pred_check
        %p121 = pneg %p42
      $region18: #{masked_berhu_loss.2} parent=15 // pred_check_branch
        %123 = sbr.rel (%p121) target = $region20
      $region19: #{masked_berhu_loss.2} parent=15 // pred_region
        %s124 = sadd.s32 %s15, %s16
        %p125 = scmp.lt.s32.totalorder %s124, 1
        %s126 = scalar_select %p125, %s124, 1
        %s127 = smul.addr %s126, 8
        %s128 = scalar_lea.vmem %s0, %s127
        %s129 = sadd.s32 %s15, %s16
      $region20: #{masked_berhu_loss.2} parent=15 // pred_fallthru
        _
      // Predicated region
      $region21: #{masked_berhu_loss.2} parent=15 // pred_check
        %p130 = pneg %p70
      $region22: #{masked_berhu_loss.2} parent=15 // pred_check_branch
        %132 = sbr.rel (%p130) target = $region24
      $region23: #{masked_berhu_loss.2} parent=15 // pred_region
        %s133 = sadd.s32 %s15, %s16
        %p134 = scmp.lt.s32.totalorder %s133, 1
        %s135 = scalar_select %p134, %s133, 1
        %s136 = smul.addr %s135, 8
        %s137 = scalar_lea.vmem %s1, %s136
        %s138 = sadd.s32 %s15, %s16
      $region24: #{masked_berhu_loss.2} parent=15 // pred_fallthru
        _
    $region16: #{masked_berhu_loss.2} parent=5 // pred_fallthru
      _
    %p139 = scmp.le.s32.totalorder 1, %s8
    %p140 = scmp.lt.s32.totalorder %s8, 3
    %p141 = pnand %p139, %p140
    %p142 = pneg %p141
    // Predicated region
    $region25: #{masked_berhu_loss.2} parent=5 // pred_check
      _
    $region26: #{masked_berhu_loss.2} parent=5 // pred_check_branch
      %144 = sbr.rel (%p141) target = $region28
    $region27: #{masked_berhu_loss.2} parent=5 // pred_region
      %s145 = ssub.s32 %s8, 1
      %s146 = sadd.s32 %s17, %s18
      %p147 = scmp.lt.s32.totalorder %s146, 1
      %s148 = scalar_select %p147, %s146, 1
      %s149 = smul.addr %s148, 8
      %s150 = scalar_lea.vmem %s0, %s149
      %p151 = pneg %p48
      %p152 = pneg %p45
      %s153 = sadd.s32 %s17, %s18
      %p154 = scmp.lt.s32.totalorder %s153, 1
      %s155 = scalar_select %p154, %s153, 1
      %s156 = smul.addr %s155, 8
      %s157 = scalar_lea.vmem %s1, %s156
      %p158 = pneg %p76
      %p159 = pneg %p73
      %p160 = pneg %p102
      %p161 = pneg %p99
      %p162 = scmp.lt.s32.totalorder %s17, 1
      %s163 = scalar_select %p162, %s17, 1
      %s164 = smul.addr %s163, 2
      %s165 = smul.addr %s164, 8
      %s166 = scalar_lea.vmem %s2, %s165
      %s167 = sadd.s32 %s17, %s18
      %p168 = scmp.lt.s32.totalorder %s167, 1
      %s169 = scalar_select %p168, %s167, 1
      %s170 = smul.addr %s169, 8
      %s171 = scalar_lea.vmem %s0, %s170
      %s172 = sadd.s32 %s17, %s18
      %s173 = sadd.s32 %s17, %s18
      %p174 = scmp.lt.s32.totalorder %s173, 1
      %s175 = scalar_select %p174, %s173, 1
      %s176 = smul.addr %s175, 8
      %s177 = scalar_lea.vmem %s1, %s176
      %s178 = sadd.s32 %s17, %s18
      %p179 = scmp.lt.s32.totalorder %s17, 1
      %s180 = scalar_select %p179, %s17, 1
      %s181 = smul.addr %s180, 2
      %s182 = smul.addr %s181, 8
      %s183 = scalar_lea.vmem %s2, %s182
      %p184 = scmp.eq.s32.totalorder %s18, 0
      // Predicated region
      $region29: #{masked_berhu_loss.2} parent=27 // pred_check
        %p185 = pneg %p184
      $region30: #{masked_berhu_loss.2} parent=27 // pred_check_branch
        %187 = sbr.rel (%p185) target = $region32
      $region31: #{masked_berhu_loss.2} parent=27 // pred_region
        %188 = vst [vmem:[#allocation2] sm:$0xff] 0.0
        %189 = vst [vmem:[#allocation3] sm:$0xff] 0.0
      $region32: #{masked_berhu_loss.2} parent=27 // pred_fallthru
        _
      %v190 = vld [vmem:[%s177] sm:$0xff]
      %v191 = vld [vmem:[%s171] sm:$0xff]
      %vm192 = vcmp.gt.f32.partialorder %v190, 0.0
      %v193 = vsub.f32 %v190, %v191
      %v194 = vand.u32 2147483647, %v193
      %v195 = vsel %vm192, %v194, 0.0
      %v196 = vsel %vm192, 1, 0
      %v197 = vcvt.s32.f32 %v196
      %v198 = vld [vmem:[#allocation2] sm:$0xff]
      %v199 = vmax.f32 %v198, %v195
      %200 = vst [vmem:[#allocation2] sm:$0xff] %v199
      %v201 = vld [vmem:[#allocation3] sm:$0xff]
      %v202 = vadd.f32 %v197, 0.0
      %v203 = vadd.f32 %v201, %v202
      %204 = vst [vmem:[#allocation3] sm:$0xff] %v203
      // Predicated region
      $region33: #{masked_berhu_loss.2} parent=27 // pred_check
        %p205 = pneg %p184
      $region34: #{masked_berhu_loss.2} parent=27 // pred_check_branch
        %207 = sbr.rel (%p205) target = $region36
      $region35: #{masked_berhu_loss.2} parent=27 // pred_region
        %v208 = vld [vmem:[#allocation2] sm:$0xff]
        %209 = vst [vmem:[%s183] sm:$0xff] %v208
        %v210 = vld [vmem:[#allocation3] sm:$0xff]
        %s211 = scalar_lea.vmem %s183, 8
        %212 = vst [vmem:[%s211] sm:$0xff] %v210
      $region36: #{masked_berhu_loss.2} parent=27 // pred_fallthru
        _
      %p213 = scmp.lt.s32.totalorder %s17, 1
      %s214 = scalar_select %p213, %s17, 1
      %s215 = smul.addr %s214, 2
      %s216 = smul.addr %s215, 8
      %s217 = scalar_lea.vmem %s2, %s216
      // Predicated region
      $region37: #{masked_berhu_loss.2} parent=27 // pred_check
        %p218 = pneg %p99
      $region38: #{masked_berhu_loss.2} parent=27 // pred_check_branch
        %220 = sbr.rel (%p218) target = $region40
      $region39: #{masked_berhu_loss.2} parent=27 // pred_region
        _
      $region40: #{masked_berhu_loss.2} parent=27 // pred_fallthru
        _
    $region28: #{masked_berhu_loss.2} parent=5 // pred_fallthru
      _
    %p221 = scmp.le.s32.totalorder 2, %s8
    // Predicated region
    $region41: #{masked_berhu_loss.2} parent=5 // pred_check
      %p222 = pneg %p221
    $region42: #{masked_berhu_loss.2} parent=5 // pred_check_branch
      %224 = sbr.rel (%p222) target = $region44
    $region43: #{masked_berhu_loss.2} parent=5 // pred_region
      %s225 = ssub.s32 %s8, 2
      // Predicated region
      $region45: #{masked_berhu_loss.2} parent=43 // pred_check
        %p226 = pneg %p105
      $region46: #{masked_berhu_loss.2} parent=43 // pred_check_branch
        %228 = sbr.rel (%p226) target = $region48
      $region47: #{masked_berhu_loss.2} parent=43 // pred_region
        %p229 = scmp.lt.s32.totalorder %s19, 1
        %s230 = scalar_select %p229, %s19, 1
        %s231 = smul.addr %s230, 2
        %s232 = smul.addr %s231, 8
        %s233 = scalar_lea.vmem %s2, %s232
      $region48: #{masked_berhu_loss.2} parent=43 // pred_fallthru
        _
    $region44: #{masked_berhu_loss.2} parent=5 // pred_fallthru
      _
  $region6: #{masked_berhu_loss.2} parent=0 // loop_footer
    %s12 = sadd.s32 1, %s8
  $region7: #{masked_berhu_loss.2} parent=0 // loop_footer_branch
    %7 = sbr.rel target = $region3
  $region8: #{masked_berhu_loss.2} parent=0 // loop_exit
    _

// kernel: masked_berhu_loss.3
$region0: #{masked_berhu_loss.3}
  #allocation0 [shape = 'u32[]', space=smem, size = 0x4, offset = 0x4, fixed_abs, tag = 'smem constant byte address 0x4 - core index']
  #allocation1 [shape = 'u32[144,128]{1,0:T(1,128)}', space=vmem, size = 0x12000, scoped, tag = 'internal scratch']
  #allocation2 [shape = 'f32[8,128]{1,0:T(8,128)}', space=vmem, size = 0x1000, scoped, tag = 'scratch operand']
  %s0 = inlined_call_operand.vmem [shape: f32[2], index: 0, kind: input, shape index: {}]
  %s1 = inlined_call_operand.vmem [shape: f32[16,128], index: 1, kind: input, shape index: {}]
  %s2 = inlined_call_operand.vmem [shape: f32[16,128], index: 2, kind: input, shape index: {}]
  %s3 = inlined_call_operand.vmem [shape: f32[2,8,128], index: 3, kind: output, shape index: {}]
  %s4 = sld [smem:[#allocation0]]
  $region57: #{masked_berhu_loss.3} parent=0
    _
  %s6 = ssub.s32 1, %s4
  %s7 = scalar_select 0, %s6, %s4
  $region1: #{masked_berhu_loss.3} parent=0
    #allocation3 [shape = 'u8[512]{0}', space=smem, size = 0x200, scoped, tag = 'input window, operand 0, single buffered']
    #allocation4 [shape = 's32[2]{0}', space=sflag, size = 0x8, scoped, tag = 'scoped memory for masked_berhu_loss.3']
    %8 = vsyncpa [#allocation4], 0
    loop: start=0, step=1, limit=4
    $region2: #{masked_berhu_loss.3} parent=1 // loop_pre_header
      _
    $region3: #{masked_berhu_loss.3} parent=1 // loop_header
      %s10 = sphi 0, %s14
      %p11 = scmp.ge.s32.totalorder %s10, 4
      %s17 = sphi 0, %s29
      %s18 = sphi 0, %s25
      %s19 = sphi 0, %s17
      %s20 = sphi 0, %s18
      %s21 = sphi 0, %s19
      %s22 = sphi 0, %s20
      %s30 = sphi 0, %s30
      %s32 = sphi 0, %s30
      %s33 = sphi 0, %s32
      %s47 = sphi 0, %s33
      %s55 = sphi 0, %s57
      %s58 = sphi 0, %s55
      %s59 = sphi 0, %s58
      %s75 = sphi 0, %s59
      %s83 = sphi 0, %s85
      %s86 = sphi 0, %s83
      %s87 = sphi 0, %s86
      %s103 = sphi 0, %s87
      %s109 = sphi 0, %s111
      %s112 = sphi 0, %s109
      %s113 = sphi 0, %s112
      %s129 = sphi 0, %s113
    $region4: #{masked_berhu_loss.3} parent=1 // loop_header_branch
      %13 = sbr.rel (%p11) target = $region8
    $region5: #{masked_berhu_loss.3} parent=1 // loop_body
      %s15 = ssub.s32 %s10, 1
      %s16 = ssub.s32 %s10, 2
      %s23 = sadd.s32 1, %s18
      %p24 = scmp.ge.s32.totalorder %s23, 1
      %s25 = scalar_select %p24, 0, %s23
      %s26 = sadd.s32 1, %s17
      %s27 = scalar_select %p24, %s26, %s17
      %p28 = scmp.ge.s32.totalorder %s27, 2
      %s29 = scalar_select %p28, 0, %s27
      %s31 = sadd.s32 %s30, 1
      %p34 = scmp.eq.s32.totalorder %s10, 1
      %p35 = scmp.ne.s32.totalorder %s30, %s32
      %p36 = scmp.eq.s32.totalorder %s10, 0
      %p37 = por %p35, %p36
      %p38 = scmp.ne.s32.totalorder %s30, %s32
      %p39 = scmp.eq.s32.totalorder %s15, 1
      %p40 = por %p38, %p39
      %p41 = scmp.ne.s32.totalorder %s32, %s33
      %p42 = scmp.eq.s32.totalorder %s15, 0
      %p43 = por %p41, %p42
      %p44 = scmp.ne.s32.totalorder %s32, %s33
      %p45 = scmp.eq.s32.totalorder %s16, 1
      %p46 = por %p44, %p45
      %p48 = scmp.ne.s32.totalorder %s33, %s47
      %p49 = scmp.eq.s32.totalorder %s16, 0
      %p50 = por %p48, %p49
      %s51 = sadd.s32 %s17, %s18
      %s52 = sadd.s32 %s29, %s25
      %s53 = ssub.s32 %s51, %s52
      %p54 = scmp.eq.s32.totalorder %s53, 0
      %s56 = sadd.s32 %s55, 1
      %s57 = scalar_select %p54, %s55, %s56
      %p60 = pneg %p54
      %p61 = scmp.eq.s32.totalorder %s10, 1
      %p62 = por %p60, %p61
      %p63 = scmp.ne.s32.totalorder %s55, %s58
      %p64 = scmp.eq.s32.totalorder %s10, 0
      %p65 = por %p63, %p64
      %p66 = scmp.ne.s32.totalorder %s55, %s58
      %p67 = scmp.eq.s32.totalorder %s15, 1
      %p68 = por %p66, %p67
      %p69 = scmp.ne.s32.totalorder %s58, %s59
      %p70 = scmp.eq.s32.totalorder %s15, 0
      %p71 = por %p69, %p70
      %p72 = scmp.ne.s32.totalorder %s58, %s59
      %p73 = scmp.eq.s32.totalorder %s16, 1
      %p74 = por %p72, %p73
      %p76 = scmp.ne.s32.totalorder %s59, %s75
      %p77 = scmp.eq.s32.totalorder %s16, 0
      %p78 = por %p76, %p77
      %s79 = sadd.s32 %s17, %s18
      %s80 = sadd.s32 %s29, %s25
      %s81 = ssub.s32 %s79, %s80
      %p82 = scmp.eq.s32.totalorder %s81, 0
      %s84 = sadd.s32 %s83, 1
      %s85 = scalar_select %p82, %s83, %s84
      %p88 = pneg %p82
      %p89 = scmp.eq.s32.totalorder %s10, 1
      %p90 = por %p88, %p89
      %p91 = scmp.ne.s32.totalorder %s83, %s86
      %p92 = scmp.eq.s32.totalorder %s10, 0
      %p93 = por %p91, %p92
      %p94 = scmp.ne.s32.totalorder %s83, %s86
      %p95 = scmp.eq.s32.totalorder %s15, 1
      %p96 = por %p94, %p95
      %p97 = scmp.ne.s32.totalorder %s86, %s87
      %p98 = scmp.eq.s32.totalorder %s15, 0
      %p99 = por %p97, %p98
      %p100 = scmp.ne.s32.totalorder %s86, %s87
      %p101 = scmp.eq.s32.totalorder %s16, 1
      %p102 = por %p100, %p101
      %p104 = scmp.ne.s32.totalorder %s87, %s103
      %p105 = scmp.eq.s32.totalorder %s16, 0
      %p106 = por %p104, %p105
      %s107 = ssub.s32 %s17, %s29
      %p108 = scmp.eq.s32.totalorder %s107, 0
      %s110 = sadd.s32 %s109, 1
      %s111 = scalar_select %p108, %s109, %s110
      %p114 = pneg %p108
      %p115 = scmp.eq.s32.totalorder %s10, 1
      %p116 = por %p114, %p115
      %p117 = scmp.ne.s32.totalorder %s109, %s112
      %p118 = scmp.eq.s32.totalorder %s10, 0
      %p119 = por %p117, %p118
      %p120 = scmp.ne.s32.totalorder %s109, %s112
      %p121 = scmp.eq.s32.totalorder %s15, 1
      %p122 = por %p120, %p121
      %p123 = scmp.ne.s32.totalorder %s112, %s113
      %p124 = scmp.eq.s32.totalorder %s15, 0
      %p125 = por %p123, %p124
      %p126 = scmp.ne.s32.totalorder %s112, %s113
      %p127 = scmp.eq.s32.totalorder %s16, 1
      %p128 = por %p126, %p127
      %p130 = scmp.ne.s32.totalorder %s113, %s129
      %p131 = scmp.eq.s32.totalorder %s16, 0
      %p132 = por %p130, %p131
      %p133 = scmp.le.s32.totalorder 1, %s10
      %p134 = scmp.lt.s32.totalorder %s10, 3
      %p135 = pnand %p133, %p134
      %p136 = pneg %p135
      // Predicated region
      $region9: #{masked_berhu_loss.3} parent=5 // pred_check
        _
      $region10: #{masked_berhu_loss.3} parent=5 // pred_check_branch
        %138 = sbr.rel (%p135) target = $region12
      $region11: #{masked_berhu_loss.3} parent=5 // pred_region
        %s139 = ssub.s32 %s10, 1
        // Predicated region
        $region13: #{masked_berhu_loss.3} parent=11 // pred_check
          %p140 = pneg %p43
        $region14: #{masked_berhu_loss.3} parent=11 // pred_check_branch
          %142 = sbr.rel (%p140) target = $region16
        $region15: #{masked_berhu_loss.3} parent=11 // pred_region
          %s144 = ssub.s32 16, 16
          %145 = vsyncadd [#allocation4], %s144
          %s147 = sshll.u32 %s0, 4
          %s148 = int_to_ptr.vmem [resolvable:$true] %s147
          %150 = dma.vmem_to_smem %s148, 16, [#allocation3], [#allocation4]
        $region16: #{masked_berhu_loss.3} parent=11 // pred_fallthru
          _
      $region12: #{masked_berhu_loss.3} parent=5 // pred_fallthru
        _
      %p151 = scmp.lt.s32.totalorder %s10, 2
      // Predicated region
      $region17: #{masked_berhu_loss.3} parent=5 // pred_check
        %p152 = pneg %p151
      $region18: #{masked_berhu_loss.3} parent=5 // pred_check_branch
        %154 = sbr.rel (%p152) target = $region20
      $region19: #{masked_berhu_loss.3} parent=5 // pred_region
        // Predicated region
        $region21: #{masked_berhu_loss.3} parent=19 // pred_check
          %p155 = pneg %p65
        $region22: #{masked_berhu_loss.3} parent=19 // pred_check_branch
          %157 = sbr.rel (%p155) target = $region24
        $region23: #{masked_berhu_loss.3} parent=19 // pred_region
          %s158 = sadd.s32 %s17, %s18
          %p159 = scmp.lt.s32.totalorder %s158, 1
          %s160 = scalar_select %p159, %s158, 1
          %s161 = smul.addr %s160, 8
          %s162 = scalar_lea.vmem %s1, %s161
          %s163 = sadd.s32 %s17, %s18
        $region24: #{masked_berhu_loss.3} parent=19 // pred_fallthru
          _
        // Predicated region
        $region25: #{masked_berhu_loss.3} parent=19 // pred_check
          %p164 = pneg %p93
        $region26: #{masked_berhu_loss.3} parent=19 // pred_check_branch
          %166 = sbr.rel (%p164) target = $region28
        $region27: #{masked_berhu_loss.3} parent=19 // pred_region
          %s167 = sadd.s32 %s17, %s18
          %p168 = scmp.lt.s32.totalorder %s167, 1
          %s169 = scalar_select %p168, %s167, 1
          %s170 = smul.addr %s169, 8
          %s171 = scalar_lea.vmem %s2, %s170
          %s172 = sadd.s32 %s17, %s18
        $region28: #{masked_berhu_loss.3} parent=19 // pred_fallthru
          _
      $region20: #{masked_berhu_loss.3} parent=5 // pred_fallthru
        _
      %p173 = scmp.le.s32.totalorder 1, %s10
      %p174 = scmp.lt.s32.totalorder %s10, 3
      %p175 = pnand %p173, %p174
      %p176 = pneg %p175
      // Predicated region
      $region29: #{masked_berhu_loss.3} parent=5 // pred_check
        _
      $region30: #{masked_berhu_loss.3} parent=5 // pred_check_branch
        %178 = sbr.rel (%p175) target = $region32
      $region31: #{masked_berhu_loss.3} parent=5 // pred_region
        %s179 = ssub.s32 %s10, 1
        // Predicated region
        $region33: #{masked_berhu_loss.3} parent=31 // pred_check
          %p180 = pneg %p43
        $region34: #{masked_berhu_loss.3} parent=31 // pred_check_branch
          %182 = sbr.rel (%p180) target = $region36
        $region35: #{masked_berhu_loss.3} parent=31 // pred_region
          %183 = dma.done [#allocation4], 16
        $region36: #{masked_berhu_loss.3} parent=31 // pred_fallthru
          _
        %184 = sfence
        %p185 = pneg %p43
        %p186 = pneg %p40
        %s187 = sadd.s32 %s19, %s20
        %p188 = scmp.lt.s32.totalorder %s187, 1
        %s189 = scalar_select %p188, %s187, 1
        %s190 = smul.addr %s189, 8
        %s191 = scalar_lea.vmem %s1, %s190
        %p192 = pneg %p71
        %p193 = pneg %p68
        %s194 = sadd.s32 %s19, %s20
        %p195 = scmp.lt.s32.totalorder %s194, 1
        %s196 = scalar_select %p195, %s194, 1
        %s197 = smul.addr %s196, 8
        %s198 = scalar_lea.vmem %s2, %s197
        %p199 = pneg %p99
        %p200 = pneg %p96
        %p201 = pneg %p125
        %p202 = pneg %p122
        %p203 = scmp.lt.s32.totalorder %s19, 1
        %s204 = scalar_select %p203, %s19, 1
        %s205 = smul.addr %s204, 8
        %s206 = scalar_lea.vmem %s3, %s205
        %s207 = sadd.s32 %s19, %s20
        %p208 = scmp.lt.s32.totalorder %s207, 1
        %s209 = scalar_select %p208, %s207, 1
        %s210 = smul.addr %s209, 8
        %s211 = scalar_lea.vmem %s1, %s210
        %s212 = sadd.s32 %s19, %s20
        %s213 = sadd.s32 %s19, %s20
        %p214 = scmp.lt.s32.totalorder %s213, 1
        %s215 = scalar_select %p214, %s213, 1
        %s216 = smul.addr %s215, 8
        %s217 = scalar_lea.vmem %s2, %s216
        %s218 = sadd.s32 %s19, %s20
        %p219 = scmp.lt.s32.totalorder %s19, 1
        %s220 = scalar_select %p219, %s19, 1
        %s221 = smul.addr %s220, 8
        %s222 = scalar_lea.vmem %s3, %s221
        %p223 = scmp.eq.s32.totalorder %s20, 0
        // Predicated region
        $region37: #{masked_berhu_loss.3} parent=31 // pred_check
          %p224 = pneg %p223
        $region38: #{masked_berhu_loss.3} parent=31 // pred_check_branch
          %226 = sbr.rel (%p224) target = $region40
        $region39: #{masked_berhu_loss.3} parent=31 // pred_region
          %227 = vst [vmem:[#allocation2] sm:$0xff] 0.0
        $region40: #{masked_berhu_loss.3} parent=31 // pred_fallthru
          _
        %s228 = sld [smem:[#allocation3]]
        %s229 = sld [smem:[#allocation3 + $0x1]]
        %v230 = vld [vmem:[%s217] sm:$0xff]
        %v231 = vld [vmem:[%s211] sm:$0xff]
        %vm232 = vcmp.gt.f32.partialorder %v230, 0.0
        %v233 = vsub.f32 %v230, %v231
        %v234 = vand.u32 2147483647, %v233
        %v235 = vsel %vm232, %v234, 0.0
        %v236 = vstv %s228
        %vm237 = vcmp.lt.f32.partialorder %v235, %v236
        %v238 = vsel %vm237, %v235, 0.0
        %vm239 = vcmp.gt.f32.partialorder %v235, %v236
        %v240 = vmul.f32 %v235, %v235
        %v241 = vstv %s229
        %v242 = vmul.f32 %v240, %v241
        %v243 = vsel %vm239, %v242, 0.0
        %v244 = vadd.f32 %v238, %v243
        %v245 = vld [vmem:[#allocation2] sm:$0xff]
        %v246 = vadd.f32 %v244, 0.0
        %v247 = vadd.f32 %v245, %v246
        %248 = vst [vmem:[#allocation2] sm:$0xff] %v247
        // Predicated region
        $region41: #{masked_berhu_loss.3} parent=31 // pred_check
          %p249 = pneg %p223
        $region42: #{masked_berhu_loss.3} parent=31 // pred_check_branch
          %251 = sbr.rel (%p249) target = $region44
        $region43: #{masked_berhu_loss.3} parent=31 // pred_region
          %v252 = vld [vmem:[#allocation2] sm:$0xff]
          %253 = vst [vmem:[%s222] sm:$0xff] %v252
        $region44: #{masked_berhu_loss.3} parent=31 // pred_fallthru
          _
        %p254 = scmp.lt.s32.totalorder %s19, 1
        %s255 = scalar_select %p254, %s19, 1
        %s256 = smul.addr %s255, 8
        %s257 = scalar_lea.vmem %s3, %s256
        // Predicated region
        $region45: #{masked_berhu_loss.3} parent=31 // pred_check
          %p258 = pneg %p122
        $region46: #{masked_berhu_loss.3} parent=31 // pred_check_branch
          %260 = sbr.rel (%p258) target = $region48
        $region47: #{masked_berhu_loss.3} parent=31 // pred_region
          _
        $region48: #{masked_berhu_loss.3} parent=31 // pred_fallthru
          _
      $region32: #{masked_berhu_loss.3} parent=5 // pred_fallthru
        _
      %p261 = scmp.le.s32.totalorder 2, %s10
      // Predicated region
      $region49: #{masked_berhu_loss.3} parent=5 // pred_check
        %p262 = pneg %p261
      $region50: #{masked_berhu_loss.3} parent=5 // pred_check_branch
        %264 = sbr.rel (%p262) target = $region52
      $region51: #{masked_berhu_loss.3} parent=5 // pred_region
        %s265 = ssub.s32 %s10, 2
        // Predicated region
        $region53: #{masked_berhu_loss.3} parent=51 // pred_check
          %p266 = pneg %p128
        $region54: #{masked_berhu_loss.3} parent=51 // pred_check_branch
          %268 = sbr.rel (%p266) target = $region56
        $region55: #{masked_berhu_loss.3} parent=51 // pred_region
          %p269 = scmp.lt.s32.totalorder %s21, 1
          %s270 = scalar_select %p269, %s21, 1
          %s271 = smul.addr %s270, 8
          %s272 = scalar_lea.vmem %s3, %s271
        $region56: #{masked_berhu_loss.3} parent=51 // pred_fallthru
          _
      $region52: #{masked_berhu_loss.3} parent=5 // pred_fallthru
        _
    $region6: #{masked_berhu_loss.3} parent=1 // loop_footer
      %s14 = sadd.s32 1, %s10
    $region7: #{masked_berhu_loss.3} parent=1 // loop_footer_branch
      %9 = sbr.rel target = $region3
    $region8: #{masked_berhu_loss.3} parent=1 // loop_exit
      _
    %273 = vsyncpa [#allocation4], 1
    %s274 = scalar_lea.sflag [#allocation4], 1
    %275 = vsyncpa %s274, 1

</llo_original>
